<compile_context>
chip_gen: v7x
topology: tpu7x:2x2x1
jax: 0.10.0
libtpu: 0.0.40
codegen_flags: <defaults>
</compile_context>

<pallas_src>
import functools
import math

import jax
import jax.numpy as jnp
from jax.experimental import pallas as pl
from jax.experimental.pallas import tpu as pltpu


def _round_up(x: int, m: int) -> int:
    return ((x + m - 1) // m) * m


def _cdiv(a: int, b: int) -> int:
    return -(-a // b)


def _erf_poly(x):
    # Abramowitz & Stegun 7.1.26 polynomial approximation of erf, |err| < 1.5e-7.
    # exp and the approximate reciprocal go to the EUP slot; the rest is VPU.
    a1 = 0.254829592
    a2 = -0.284496736
    a3 = 1.421413741
    a4 = -1.453152027
    a5 = 1.061405429
    p = 0.3275911
    sign = jnp.where(x >= 0.0, 1.0, -1.0)
    ax = jnp.abs(x)
    t = pl.reciprocal(1.0 + p * ax, approx=True)      # EUP, not VALU divide
    poly = ((((a5 * t + a4) * t + a3) * t + a2) * t + a1) * t
    return sign * (1.0 - poly * jnp.exp(-ax * ax))


def _gelu_exact(x):
    # torch.nn.GELU() default (approximate='none'): 0.5 * x * (1 + erf(x/sqrt(2)))
    return 0.5 * x * (1.0 + _erf_poly(x * (1.0 / math.sqrt(2.0))))


def _encoder_kernel(x_ref, w1_ref, b1_ref, w2_ref, b2_ref, o_ref, *,
                    k_dim, first_layer_mxu, bf16_matmul):
    f32 = jnp.float32

    # ---- Layer 1: Linear(input_dim -> output_dim) ----
    if first_layer_mxu:
        x = x_ref[...]
        if bf16_matmul:
            x = x.astype(jnp.bfloat16)
        h = jnp.dot(x, w1_ref[...], preferred_element_type=f32) + b1_ref[...]
    else:
        # Tiny one-hot input_dim: VPU rank-1 updates instead of a degenerate
        # (tb, K)@(K, Np) MXU matmul.  Unrolled over K (K <= 32).
        x = x_ref[...].astype(f32)          # (tb, K)
        w1 = w1_ref[...]                    # (K, Np) f32
        h = b1_ref[...]                     # (1, Np) -> broadcasts to (tb, Np)
        for k in range(k_dim):
            h = h + x[:, k:k + 1] * w1[k:k + 1, :]

    # ---- GELU (exact erf form), f32 on the VPU/EUP ----
    h = _gelu_exact(h)

    # ---- Layer 2: Linear(output_dim -> output_dim) on the MXU ----
    if bf16_matmul:
        h = h.astype(jnp.bfloat16)
    y = jnp.dot(h, w2_ref[...], preferred_element_type=f32) + b2_ref[...]
    o_ref[...] = y.astype(o_ref.dtype)


def one_hot_attribute_encoder(x, w1, b1, w2, b2, *, tile_b: int = 1024,
                              bf16_matmul: bool = True):
    """Fused Linear -> GELU(exact) -> Linear forward pass on TPU.

    Args:
      x : [B, input_dim] attributes (any float/int dtype; cast to f32).
      w1: [input_dim, output_dim]  (torch nn.Linear stores [out, in]; pass weight.T)
      b1: [output_dim]
      w2: [output_dim, output_dim] (weight.T)
      b2: [output_dim]
      bf16_matmul: run the MXU matmul(s) with bf16 operands / f32 accumulation
        (~1e-3 deviation from exact f32 torch semantics, 2-4x MXU throughput).
    Returns:
      [B, output_dim] float32
    """
    B, K = x.shape
    Kw, N = w1.shape
    assert Kw == K, (Kw, K)
    assert w2.shape == (N, N) and b1.shape == (N,) and b2.shape == (N,)

    f32 = jnp.float32
    Np = _round_up(N, 128)
    first_layer_mxu = K > 32   # one-hot attribute encoders have tiny K -> VPU path

    # ---- batch tiling: pad at most to the next multiple of 8 per tile, and
    # ---- keep >= 2 grid steps when possible so v7x can use both TensorCores.
    Bp8 = _round_up(B, 8)
    n_tiles = max(1, _cdiv(Bp8, max(8, tile_b)))
    if Bp8 >= 16:
        n_tiles = max(n_tiles, 2)
    tb = _round_up(_cdiv(Bp8, n_tiles), 8)
    Bp = n_tiles * tb

    # ---- weights / biases (tiny; one-time casts, padded only if needed) ----
    w_dtype = jnp.bfloat16 if bf16_matmul else f32
    if first_layer_mxu:
        Kp = _round_up(K, 128)
        w1p = jnp.zeros((Kp, Np), w_dtype).at[:K, :N].set(w1.astype(w_dtype))
    else:
        Kp = K
        if Np != N:
            w1p = jnp.zeros((K, Np), f32).at[:, :N].set(w1.astype(f32))
        else:
            w1p = w1.astype(f32)

    b1p = b1.astype(f32).reshape(1, N)
    b2p = b2.astype(f32).reshape(1, N)
    if Np != N:
        b1p = jnp.zeros((1, Np), f32).at[:, :N].set(b1p)
        b2p = jnp.zeros((1, Np), f32).at[:, :N].set(b2p)
        w2p = jnp.zeros((Np, Np), w_dtype).at[:N, :N].set(w2.astype(w_dtype))
    else:
        w2p = w2.astype(w_dtype)

    # ---- x: keep unpadded (no 4 -> 128 lane blow-up); pad only if required ----
    xp = x if x.dtype == f32 else x.astype(f32)
    if Bp != B or Kp != K:
        xp = jnp.zeros((Bp, Kp), f32).at[:B, :K].set(xp)

    grid = (Bp // tb,)

    kernel = functools.partial(_encoder_kernel, k_dim=K,
                               first_layer_mxu=first_layer_mxu,
                               bf16_matmul=bf16_matmul)

    bytes_accessed = int(
        Bp * Kp * 4 + Bp * Np * 4
        + w1p.size * w1p.dtype.itemsize + w2p.size * w2p.dtype.itemsize
        + b1p.size * 4 + b2p.size * 4)
    cost = pl.CostEstimate(
        flops=int(2 * Bp * Kp * Np + 2 * Bp * Np * Np + 10 * Bp * Np),
        transcendentals=int(2 * Bp * Np),     # exp + approx-reciprocal per element
        bytes_accessed=bytes_accessed,
    )

    out = pl.pallas_call(
        kernel,
        out_shape=jax.ShapeDtypeStruct((Bp, Np), f32),
        grid_spec=pltpu.PrefetchScalarGridSpec(
            num_scalar_prefetch=0,
            grid=grid,
            in_specs=[
                pl.BlockSpec((tb, Kp), lambda i: (i, 0)),   # x rows: streamed, unpadded K
                pl.BlockSpec((Kp, Np), lambda i: (0, 0)),   # w1: VMEM-resident
                pl.BlockSpec((1, Np), lambda i: (0, 0)),    # b1: VMEM-resident
                pl.BlockSpec((Np, Np), lambda i: (0, 0)),   # w2: VMEM-resident (bf16)
                pl.BlockSpec((1, Np), lambda i: (0, 0)),    # b2: VMEM-resident
            ],
            out_specs=pl.BlockSpec((tb, Np), lambda i: (i, 0)),
        ),
        compiler_params=pltpu.CompilerParams(
            dimension_semantics=("parallel",),
        ),
        cost_estimate=cost,
    )(xp, w1p, b1p, w2p, b2p)

    if Bp != B or Np != N:
        out = out[:B, :N]
    return out


if __name__ == "__main__":
    key = jax.random.PRNGKey(0)
    k_cls, k_w1, k_b1, k_w2, k_b2 = jax.random.split(key, 5)

    # Small shapes consistent with the module: x is [batch_size, input_dim]
    # of concatenated one-hot attributes; output_dim = 128 (module default).
    batch, input_dim, output_dim = 8, 4, 128

    classes = jax.random.randint(k_cls, (batch,), 0, input_dim)
    x = jax.nn.one_hot(classes, input_dim, dtype=jnp.float32)           # [8, 4]

    w1 = 0.1 * jax.random.normal(k_w1, (input_dim, output_dim), jnp.float32)
    b1 = 0.1 * jax.random.normal(k_b1, (output_dim,), jnp.float32)
    w2 = 0.1 * jax.random.normal(k_w2, (output_dim, output_dim), jnp.float32)
    b2 = 0.1 * jax.random.normal(k_b2, (output_dim,), jnp.float32)

    y = one_hot_attribute_encoder(x, w1, b1, w2, b2)
    y = jax.block_until_ready(y)

    # Pure-JAX reference (exact GELU, same math as torch nn.GELU default).
    h_ref = x @ w1 + b1
    h_ref = jax.nn.gelu(h_ref, approximate=False)
    y_ref = h_ref @ w2 + b2

    assert y.shape == (batch, output_dim), y.shape
    assert y.dtype == jnp.float32, y.dtype
    assert bool(jnp.all(jnp.isfinite(y)))
    # Tolerance covers the documented bf16-operand MXU path (~1e-3 deviation
    # from exact f32 torch semantics) plus the approx EUP reciprocal in erf.
    err = float(jnp.max(jnp.abs(y - y_ref)))
    assert err < 1e-2, err

    print("KERNEL_OK")
</pallas_src>

<mosaic_0001>
module attributes {stable_mosaic.version = 11 : i64} {
  func.func @_encoder_kernel(%arg0: i32, %arg1: memref<8x4xf32, #tpu.memory_space<vmem>>, %arg2: memref<4x128xf32, #tpu.memory_space<vmem>>, %arg3: memref<1x128xf32, #tpu.memory_space<vmem>>, %arg4: memref<128x128xbf16, #tpu.memory_space<vmem>>, %arg5: memref<1x128xf32, #tpu.memory_space<vmem>>, %arg6: memref<8x128xf32, #tpu.memory_space<vmem>>) attributes {dimension_semantics = [#tpu.dimension_semantics<parallel>], iteration_bounds = array<i64: 1>, scalar_prefetch = 0 : i64, scratch_operands = 0 : i64, tpu.core_type = #tpu.core_type<tc>, window_params = [{transform_indices = @transform_0, window_bounds = array<i64: 8, 4>}, {pipeline_mode = #tpu.pipeline_mode<synchronous>, transform_indices = @transform_1, window_bounds = array<i64: 4, 128>}, {pipeline_mode = #tpu.pipeline_mode<synchronous>, transform_indices = @transform_2, window_bounds = array<i64: 1, 128>}, {pipeline_mode = #tpu.pipeline_mode<synchronous>, transform_indices = @transform_3, window_bounds = array<i64: 128, 128>}, {pipeline_mode = #tpu.pipeline_mode<synchronous>, transform_indices = @transform_4, window_bounds = array<i64: 1, 128>}, {transform_indices = @transform_5, window_bounds = array<i64: 8, 128>}]} {
    %c0 = arith.constant 0 : index
    %c0_0 = arith.constant 0 : index
    %0 = vector.load %arg1[%c0, %c0_0] : memref<8x4xf32, #tpu.memory_space<vmem>>, vector<8x4xf32>
    %c0_1 = arith.constant 0 : index
    %c0_2 = arith.constant 0 : index
    %1 = vector.load %arg2[%c0_1, %c0_2] : memref<4x128xf32, #tpu.memory_space<vmem>>, vector<4x128xf32>
    %c0_3 = arith.constant 0 : index
    %c0_4 = arith.constant 0 : index
    %2 = vector.load %arg3[%c0_3, %c0_4] : memref<1x128xf32, #tpu.memory_space<vmem>>, vector<1x128xf32>
    %3 = vector.extract_strided_slice %0 {offsets = [0, 0], sizes = [8, 1], strides = [1, 1]} : vector<8x4xf32> to vector<8x1xf32>
    %4 = vector.extract_strided_slice %1 {offsets = [0, 0], sizes = [1, 128], strides = [1, 1]} : vector<4x128xf32> to vector<1x128xf32>
    %5 = vector.broadcast %3 : vector<8x1xf32> to vector<8x128xf32>
    %6 = vector.broadcast %4 : vector<1x128xf32> to vector<8x128xf32>
    %7 = arith.mulf %5, %6 : vector<8x128xf32>
    %8 = vector.broadcast %2 : vector<1x128xf32> to vector<8x128xf32>
    %9 = arith.addf %8, %7 : vector<8x128xf32>
    %10 = vector.extract_strided_slice %0 {offsets = [0, 1], sizes = [8, 1], strides = [1, 1]} : vector<8x4xf32> to vector<8x1xf32>
    %11 = vector.extract_strided_slice %1 {offsets = [1, 0], sizes = [1, 128], strides = [1, 1]} : vector<4x128xf32> to vector<1x128xf32>
    %12 = vector.broadcast %10 : vector<8x1xf32> to vector<8x128xf32>
    %13 = vector.broadcast %11 : vector<1x128xf32> to vector<8x128xf32>
    %14 = arith.mulf %12, %13 : vector<8x128xf32>
    %15 = arith.addf %9, %14 : vector<8x128xf32>
    %16 = vector.extract_strided_slice %0 {offsets = [0, 2], sizes = [8, 1], strides = [1, 1]} : vector<8x4xf32> to vector<8x1xf32>
    %17 = vector.extract_strided_slice %1 {offsets = [2, 0], sizes = [1, 128], strides = [1, 1]} : vector<4x128xf32> to vector<1x128xf32>
    %18 = vector.broadcast %16 : vector<8x1xf32> to vector<8x128xf32>
    %19 = vector.broadcast %17 : vector<1x128xf32> to vector<8x128xf32>
    %20 = arith.mulf %18, %19 : vector<8x128xf32>
    %21 = arith.addf %15, %20 : vector<8x128xf32>
    %22 = vector.extract_strided_slice %0 {offsets = [0, 3], sizes = [8, 1], strides = [1, 1]} : vector<8x4xf32> to vector<8x1xf32>
    %23 = vector.extract_strided_slice %1 {offsets = [3, 0], sizes = [1, 128], strides = [1, 1]} : vector<4x128xf32> to vector<1x128xf32>
    %24 = vector.broadcast %22 : vector<8x1xf32> to vector<8x128xf32>
    %25 = vector.broadcast %23 : vector<1x128xf32> to vector<8x128xf32>
    %26 = arith.mulf %24, %25 : vector<8x128xf32>
    %27 = arith.addf %21, %26 : vector<8x128xf32>
    %cst = arith.constant 5.000000e-01 : f32
    %28 = vector.broadcast %cst : f32 to vector<8x128xf32>
    %29 = arith.mulf %28, %27 : vector<8x128xf32>
    %cst_5 = arith.constant 0.707106769 : f32
    %30 = vector.broadcast %cst_5 : f32 to vector<8x128xf32>
    %31 = arith.mulf %27, %30 : vector<8x128xf32>
    %cst_6 = arith.constant 0.000000e+00 : f32
    %32 = vector.broadcast %cst_6 : f32 to vector<8x128xf32>
    %33 = arith.cmpf oge, %31, %32 : vector<8x128xf32>
    %cst_7 = arith.constant 1.000000e+00 : f32
    %cst_8 = arith.constant -1.000000e+00 : f32
    %34 = vector.broadcast %cst_7 : f32 to vector<8x128xf32>
    %35 = vector.broadcast %cst_8 : f32 to vector<8x128xf32>
    %36 = arith.select %33, %34, %35 : vector<8x128xi1>, vector<8x128xf32>
    %37 = math.absf %31 : vector<8x128xf32>
    %cst_9 = arith.constant 0.327591091 : f32
    %38 = vector.broadcast %cst_9 : f32 to vector<8x128xf32>
    %39 = arith.mulf %38, %37 : vector<8x128xf32>
    %cst_10 = arith.constant 1.000000e+00 : f32
    %40 = vector.broadcast %cst_10 : f32 to vector<8x128xf32>
    %41 = arith.addf %40, %39 : vector<8x128xf32>
    %42 = tpu.reciprocal %41 {approx = true} : vector<8x128xf32> -> vector<8x128xf32>
    %cst_11 = arith.constant 1.06140542 : f32
    %43 = vector.broadcast %cst_11 : f32 to vector<8x128xf32>
    %44 = arith.mulf %43, %42 : vector<8x128xf32>
    %cst_12 = arith.constant -1.45315206 : f32
    %45 = vector.broadcast %cst_12 : f32 to vector<8x128xf32>
    %46 = arith.addf %44, %45 : vector<8x128xf32>
    %47 = arith.mulf %46, %42 : vector<8x128xf32>
    %cst_13 = arith.constant 1.42141378 : f32
    %48 = vector.broadcast %cst_13 : f32 to vector<8x128xf32>
    %49 = arith.addf %47, %48 : vector<8x128xf32>
    %50 = arith.mulf %49, %42 : vector<8x128xf32>
    %cst_14 = arith.constant -0.284496725 : f32
    %51 = vector.broadcast %cst_14 : f32 to vector<8x128xf32>
    %52 = arith.addf %50, %51 : vector<8x128xf32>
    %53 = arith.mulf %52, %42 : vector<8x128xf32>
    %cst_15 = arith.constant 0.254829586 : f32
    %54 = vector.broadcast %cst_15 : f32 to vector<8x128xf32>
    %55 = arith.addf %53, %54 : vector<8x128xf32>
    %56 = arith.mulf %55, %42 : vector<8x128xf32>
    %cst_16 = arith.constant 0.000000e+00 : f32
    %57 = vector.broadcast %cst_16 : f32 to vector<8x128xf32>
    %58 = arith.subf %57, %37 : vector<8x128xf32>
    %59 = arith.mulf %58, %37 : vector<8x128xf32>
    %60 = math.exp %59 : vector<8x128xf32>
    %61 = arith.mulf %56, %60 : vector<8x128xf32>
    %cst_17 = arith.constant 1.000000e+00 : f32
    %62 = vector.broadcast %cst_17 : f32 to vector<8x128xf32>
    %63 = arith.subf %62, %61 : vector<8x128xf32>
    %64 = arith.mulf %36, %63 : vector<8x128xf32>
    %cst_18 = arith.constant 1.000000e+00 : f32
    %65 = vector.broadcast %cst_18 : f32 to vector<8x128xf32>
    %66 = arith.addf %65, %64 : vector<8x128xf32>
    %67 = arith.mulf %29, %66 : vector<8x128xf32>
    %68 = arith.truncf %67 : vector<8x128xf32> to vector<8x128xbf16>
    %c0_19 = arith.constant 0 : index
    %c0_20 = arith.constant 0 : index
    %69 = vector.load %arg4[%c0_19, %c0_20] : memref<128x128xbf16, #tpu.memory_space<vmem>>, vector<128x128xbf16>
    %cst_21 = arith.constant dense<0.000000e+00> : vector<8x128xf32>
    %70 = tpu.matmul %68, %69, %cst_21 {dimension_numbers = #tpu.dot_dimension_numbers<[1], [0], [0], [1], [0, 0, 1, 1], [], []>} : vector<8x128xbf16>, vector<128x128xbf16>, vector<8x128xf32> -> vector<8x128xf32>
    %c0_22 = arith.constant 0 : index
    %c0_23 = arith.constant 0 : index
    %71 = vector.load %arg5[%c0_22, %c0_23] : memref<1x128xf32, #tpu.memory_space<vmem>>, vector<1x128xf32>
    %72 = vector.broadcast %71 : vector<1x128xf32> to vector<8x128xf32>
    %73 = arith.addf %70, %72 : vector<8x128xf32>
    %c0_24 = arith.constant 0 : index
    %c0_25 = arith.constant 0 : index
    %74 = vector.load %arg6[%c0_24, %c0_25] : memref<8x128xf32, #tpu.memory_space<vmem>>, vector<8x128xf32>
    tpu.vector_store %arg6[%c0_24, %c0_25], %73 {strides = array<i32>} : memref<8x128xf32, #tpu.memory_space<vmem>>, vector<8x128xf32>,
    return
  }
  func.func @transform_0(%arg0: i32) -> (i32, i32) {
    %c0_i32 = arith.constant 0 : i32
    %c0_i32_0 = arith.constant 0 : i32
    return %arg0, %c0_i32 : i32, i32
  }
  func.func @transform_1(%arg0: i32) -> (i32, i32) {
    %c0_i32 = arith.constant 0 : i32
    %c0_i32_0 = arith.constant 0 : i32
    %c0_i32_1 = arith.constant 0 : i32
    return %c0_i32, %c0_i32_0 : i32, i32
  }
  func.func @transform_2(%arg0: i32) -> (i32, i32) {
    %c0_i32 = arith.constant 0 : i32
    %c0_i32_0 = arith.constant 0 : i32
    %c0_i32_1 = arith.constant 0 : i32
    return %c0_i32, %c0_i32_0 : i32, i32
  }
  func.func @transform_3(%arg0: i32) -> (i32, i32) {
    %c0_i32 = arith.constant 0 : i32
    %c0_i32_0 = arith.constant 0 : i32
    %c0_i32_1 = arith.constant 0 : i32
    return %c0_i32, %c0_i32_0 : i32, i32
  }
  func.func @transform_4(%arg0: i32) -> (i32, i32) {
    %c0_i32 = arith.constant 0 : i32
    %c0_i32_0 = arith.constant 0 : i32
    %c0_i32_1 = arith.constant 0 : i32
    return %c0_i32, %c0_i32_0 : i32, i32
  }
  func.func @transform_5(%arg0: i32) -> (i32, i32) {
    %c0_i32 = arith.constant 0 : i32
    %c0_i32_0 = arith.constant 0 : i32
    return %arg0, %c0_i32 : i32, i32
  }
}

</mosaic_0001>

<llo_original>
// kernel: tpu_custom_call.1
$region0: #{tpu_custom_call.1}
  #allocation0 [shape = 'u32[]', space=smem, size = 0x4, offset = 0x4, fixed_abs, tag = 'smem constant byte address 0x4 - core index']
  #allocation1 [shape = 'u32[144,128]{1,0:T(1,128)}', space=vmem, size = 0x12000, scoped, tag = 'internal scratch']
  %s0 = inlined_call_operand.vmem [shape: f32[8,4], index: 0, kind: input, shape index: {}]
  %s1 = inlined_call_operand.vmem [shape: f32[4,128], index: 1, kind: input, shape index: {}]
  %s2 = inlined_call_operand.vmem [shape: f32[1,128], index: 2, kind: input, shape index: {}]
  %s3 = inlined_call_operand.hbm [shape: bf16[128,128], index: 3, kind: input, shape index: {}]
  %s4 = inlined_call_operand.vmem [shape: f32[1,128], index: 4, kind: input, shape index: {}]
  %s5 = inlined_call_operand.hbm [shape: f32[8,128], index: 5, kind: output, shape index: {}]
  %s6 = sld [smem:[#allocation0]]
  $region34: #{tpu_custom_call.1} parent=0
    _
  %s8 = ssub.s32 1, %s6
  %s9 = scalar_select 0, %s8, %s6
  $region1: #{tpu_custom_call.1} parent=0
    #allocation2 [shape = 'u8[32768]{0}', space=vmem, size = 0x8000, scoped, tag = 'input window, operand 3, single buffered']
    #allocation3 [shape = 's32[1]{0}', space=sflag, size = 0x4, scoped, tag = 'scoped memory for tpu_custom_call.1']
    #allocation4 [shape = 's32[1]{0}', space=sflag, size = 0x4, scoped, tag = 'scoped memory for tpu_custom_call.1']
    #allocation5 [shape = 'u8[4096]{0}', space=vmem, size = 0x1000, scoped, tag = 'output window, operand 0, single buffered']
    %10 = vsyncpa [#allocation3], 0
    %11 = vsyncpa [#allocation4], 0
    // Predicated region
    $region2: #{tpu_custom_call.1} parent=1 // pred_check
      _
    $region3: #{tpu_custom_call.1} parent=1 // pred_check_branch
      %13 = sbr.rel (0) target = $region5
    $region4: #{tpu_custom_call.1} parent=1 // pred_region
      _
    $region5: #{tpu_custom_call.1} parent=1 // pred_fallthru
      _
    // Predicated region
    $region6: #{tpu_custom_call.1} parent=1 // pred_check
      _
    $region7: #{tpu_custom_call.1} parent=1 // pred_check_branch
      %15 = sbr.rel (0) target = $region9
    $region8: #{tpu_custom_call.1} parent=1 // pred_region
      _
    $region9: #{tpu_custom_call.1} parent=1 // pred_fallthru
      _
    // Predicated region
    $region10: #{tpu_custom_call.1} parent=1 // pred_check
      _
    $region11: #{tpu_custom_call.1} parent=1 // pred_check_branch
      %17 = sbr.rel (0) target = $region13
    $region12: #{tpu_custom_call.1} parent=1 // pred_region
      _
    $region13: #{tpu_custom_call.1} parent=1 // pred_fallthru
      _
    // Predicated region
    $region14: #{tpu_custom_call.1} parent=1 // pred_check
      _
    $region15: #{tpu_custom_call.1} parent=1 // pred_check_branch
      %19 = sbr.rel (0) target = $region17
    $region16: #{tpu_custom_call.1} parent=1 // pred_region
      %s21 = ssub.s32 1024, 1024
      %22 = vsyncadd [#allocation3], %s21
      %s23 = sshll.u32 [#allocation2], 4
      %s24 = int_to_ptr.vmem [resolvable:$true] %s23
      %29 = dma.hbm_to_vmem [thread:$0]  %s3, 1024, %s24, [#allocation3], 64, 64, 4
    $region17: #{tpu_custom_call.1} parent=1 // pred_fallthru
      _
    // Predicated region
    $region18: #{tpu_custom_call.1} parent=1 // pred_check
      _
    $region19: #{tpu_custom_call.1} parent=1 // pred_check_branch
      %31 = sbr.rel (0) target = $region21
    $region20: #{tpu_custom_call.1} parent=1 // pred_region
      _
    $region21: #{tpu_custom_call.1} parent=1 // pred_fallthru
      _
    // Predicated region
    $region22: #{tpu_custom_call.1} parent=1 // pred_check
      _
    $region23: #{tpu_custom_call.1} parent=1 // pred_check_branch
      %33 = sbr.rel (0) target = $region25
    $region24: #{tpu_custom_call.1} parent=1 // pred_region
      %34 = dma.done [#allocation3], 1024
    $region25: #{tpu_custom_call.1} parent=1 // pred_fallthru
      _
    %v36 = vld [vmem:[%s0] sm:$0xff]
    %v37 = vld [vmem:[%s1] sm:$0xf]
    %v38 = vld [vmem:[%s2] sm:$0x1]
    %40 = vset.pattern.permute.xlu0 0
    %41 = vperm.xlu0 %40, %v36
    %v42 = vpop.permute.xlu0 %41
    %v44 = vlaneseq
    %v45 = vshrl.u32 %v44, 7
    %v46 = vsub.s32 0, %v45
    %v47 = vrot.slane %v37, %v46
    %v48 = vmul.f32 %v42, %v47
    %v50 = vlaneseq
    %v51 = vshrl.u32 %v50, 7
    %v52 = vsub.s32 0, %v51
    %v53 = vrot.slane %v38, %v52
    %v55 = vadd.f32 %v53, %v48
    %56 = vset.pattern.permute.xlu0 1
    %57 = vperm.xlu0 %56, %v36
    %v58 = vpop.permute.xlu0 %57
    %v60 = vlaneseq
    %v61 = vshrl.u32 %v60, 7
    %v62 = vsub.s32 1, %v61
    %v63 = vrot.slane %v37, %v62
    %v64 = vmul.f32 %v58, %v63
    %v65 = vadd.f32 %v55, %v64
    %66 = vset.pattern.permute.xlu0 2
    %67 = vperm.xlu0 %66, %v36
    %v68 = vpop.permute.xlu0 %67
    %v70 = vlaneseq
    %v71 = vshrl.u32 %v70, 7
    %v72 = vsub.s32 2, %v71
    %v73 = vrot.slane %v37, %v72
    %v74 = vmul.f32 %v68, %v73
    %v75 = vadd.f32 %v65, %v74
    %76 = vset.pattern.permute.xlu0 3
    %77 = vperm.xlu0 %76, %v36
    %v78 = vpop.permute.xlu0 %77
    %v80 = vlaneseq
    %v81 = vshrl.u32 %v80, 7
    %v82 = vsub.s32 3, %v81
    %v83 = vrot.slane %v37, %v82
    %v84 = vmul.f32 %v78, %v83
    %v85 = vadd.f32 %v75, %v84
    %v86 = vmul.f32 %v85, 0.5
    %v87 = vmul.f32 %v85, 0.70710677
    %vm88 = vcmp.ge.f32.partialorder %v87, 0.0
    %v89 = vsel %vm88, 1.0, -1.0
    %v90 = vand.u32 2147483647, %v87
    %v91 = vmul.f32 %v90, 0.3275911
    %v92 = vadd.f32 %v91, 1.0
    %v93 = vrcp.pop %v92
    %v94 = vmul.f32 %v93, 1.0614054
    %v95 = vadd.f32 %v94, -1.4531521
    %v96 = vmul.f32 %v95, %v93
    %v97 = vadd.f32 %v96, 1.4214138
    %v98 = vmul.f32 %v97, %v93
    %v99 = vadd.f32 %v98, -0.28449672
    %v100 = vmul.f32 %v99, %v93
    %v101 = vadd.f32 %v100, 0.2548296
    %v102 = vmul.f32 %v101, %v93
    %v103 = vsub.f32 0.0, %v90
    %v104 = vmul.f32 %v103, %v90
    %v105 = vmul.f32 %v104, 1.442695
    %v106 = vpow.pop %v105
    %v107 = vmul.f32 %v102, %v106
    %v108 = vsub.f32 1.0, %v107
    %v109 = vmul.f32 %v89, %v108
    %v110 = vadd.f32 %v109, 1.0
    %v111 = vmul.f32 %v86, %v110
    %v112 = vpack.c.bf16 %v111, %v111
    %v113 = vld [vmem:[#allocation2] sm:$0xf]
    %v114 = vld [vmem:[#allocation2 + $0x4] sm:$0xf]
    %v115 = vld [vmem:[#allocation2 + $0x8] sm:$0xf]
    %v116 = vld [vmem:[#allocation2 + $0xc] sm:$0xf]
    %v117 = vld [vmem:[#allocation2 + $0x10] sm:$0xf]
    %v118 = vld [vmem:[#allocation2 + $0x14] sm:$0xf]
    %v119 = vld [vmem:[#allocation2 + $0x18] sm:$0xf]
    %v120 = vld [vmem:[#allocation2 + $0x1c] sm:$0xf]
    %v121 = vld [vmem:[#allocation2 + $0x20] sm:$0xf]
    %v122 = vld [vmem:[#allocation2 + $0x24] sm:$0xf]
    %v123 = vld [vmem:[#allocation2 + $0x28] sm:$0xf]
    %v124 = vld [vmem:[#allocation2 + $0x2c] sm:$0xf]
    %v125 = vld [vmem:[#allocation2 + $0x30] sm:$0xf]
    %v126 = vld [vmem:[#allocation2 + $0x34] sm:$0xf]
    %v127 = vld [vmem:[#allocation2 + $0x38] sm:$0xf]
    %v128 = vld [vmem:[#allocation2 + $0x3c] sm:$0xf]
    %v129 = vld [vmem:[%s4] sm:$0x1]
    %v131 = vlaneseq
    %v132 = vshrl.u32 %v131, 7
    %v133 = vsub.s32 0, %v132
    %v134 = vrot.slane %v129, %v133
    %v152 = vunpack.c.l.b16 %v113
    %v153 = vunpack.c.l.b16 %v114
    %v154 = vunpack.c.l.b16 %v115
    %v155 = vunpack.c.l.b16 %v116
    %v156 = vunpack.c.l.b16 %v117
    %v157 = vunpack.c.l.b16 %v118
    %v158 = vunpack.c.l.b16 %v119
    %v159 = vunpack.c.l.b16 %v120
    %v160 = vunpack.c.l.b16 %v121
    %v161 = vunpack.c.l.b16 %v122
    %v162 = vunpack.c.l.b16 %v123
    %v163 = vunpack.c.l.b16 %v124
    %v164 = vunpack.c.l.b16 %v125
    %v165 = vunpack.c.l.b16 %v126
    %v166 = vunpack.c.l.b16 %v127
    %v167 = vunpack.c.l.b16 %v128
    %v168 = vpack.c.b16 %v153, %v152
    %v169 = vpack.c.b16 %v155, %v154
    %v170 = vpack.c.b16 %v157, %v156
    %v171 = vpack.c.b16 %v159, %v158
    %v172 = vpack.c.b16 %v161, %v160
    %v173 = vpack.c.b16 %v163, %v162
    %v174 = vpack.c.b16 %v165, %v164
    %v175 = vpack.c.b16 %v167, %v166
    %184 = vmatprep.subr.bf16.mxu0 0
    %185 = vmatpush1.bf16.msra.mxu0 %v168
    %186 = vmatprep.subr.bf16.mxu0 0
    %187 = vmatpush1.bf16.msra.mxu0 %v169
    %188 = vmatprep.subr.bf16.mxu0 0
    %189 = vmatpush1.bf16.msra.mxu0 %v170
    %190 = vmatprep.subr.bf16.mxu0 0
    %191 = vmatpush1.bf16.msra.mxu0 %v171
    %192 = vmatprep.subr.bf16.mxu0 0
    %193 = vmatpush1.bf16.msra.mxu0 %v172
    %194 = vmatprep.subr.bf16.mxu0 0
    %195 = vmatpush1.bf16.msra.mxu0 %v173
    %196 = vmatprep.subr.bf16.mxu0 0
    %197 = vmatpush1.bf16.msra.mxu0 %v174
    %198 = vmatprep.subr.bf16.mxu0 0
    %199 = vmatpush1.bf16.msra.mxu0 %v175
    %200 = vmatprep.subr.bf16.mxu0 0
    %201 = vmatpush1.bf16.msra.mxu0 0
    %202 = vmatprep.subr.bf16.mxu0 0
    %203 = vmatpush1.bf16.msra.mxu0 0
    %204 = vmatprep.subr.bf16.mxu0 0
    %205 = vmatpush1.bf16.msra.mxu0 0
    %206 = vmatprep.subr.bf16.mxu0 0
    %207 = vmatpush1.bf16.msra.mxu0 0
    %208 = vmatprep.subr.bf16.mxu0 0
    %209 = vmatpush1.bf16.msra.mxu0 0
    %210 = vmatprep.subr.bf16.mxu0 0
    %211 = vmatpush1.bf16.msra.mxu0 0
    %212 = vmatprep.subr.bf16.mxu0 0
    %213 = vmatpush1.bf16.msra.mxu0 0
    %214 = vmatprep.subr.bf16.mxu0 0
    %215 = vmatpush1.bf16.msra.mxu0 0
    %216 = vmatprep.mubr.bf16.mxu0 0
    %217 = vmatmul.mubr.bf16.gmra.mrb[0].mxu0 %v112
    %v218 = vpop.f32.mrb[0].mxu0
    %v219 = vadd.f32 %v134, %v218
    %v220 = vpop.f32.mrb[0].mxu0
    %v221 = vpop.f32.mrb[0].mxu0
    %v222 = vpop.f32.mrb[0].mxu0
    %223 = vdwg.mxu0
    %224 = vst [vmem:[#allocation5] sm:$0xff] %v219
    // Predicated region
    $region26: #{tpu_custom_call.1} parent=1 // pred_check
      _
    $region27: #{tpu_custom_call.1} parent=1 // pred_check_branch
      %226 = sbr.rel (0) target = $region29
    $region28: #{tpu_custom_call.1} parent=1 // pred_region
      %s228 = ssub.s32 128, 128
      %229 = vsyncadd [#allocation4], %s228
      %s231 = sshll.u32 [#allocation5], 4
      %s232 = int_to_ptr.vmem [resolvable:$true] %s231
      %234 = dma.vmem_to_hbm [thread:$0]  %s232, 128, %s5, [#allocation4]
    $region29: #{tpu_custom_call.1} parent=1 // pred_fallthru
      _
    // Predicated region
    $region30: #{tpu_custom_call.1} parent=1 // pred_check
      _
    $region31: #{tpu_custom_call.1} parent=1 // pred_check_branch
      %236 = sbr.rel (0) target = $region33
    $region32: #{tpu_custom_call.1} parent=1 // pred_region
      %237 = dma.done [#allocation4], 128
    $region33: #{tpu_custom_call.1} parent=1 // pred_fallthru
      _
    %238 = vsyncpa [#allocation3], 1
    %239 = vsyncpa [#allocation4], 1

</llo_original>
